<compile_context>
chip_gen: v5e
topology: v5e:2x2
jax: 0.10.0
libtpu: 0.0.40
codegen_flags: <defaults>
</compile_context>

<pallas_src>
import math

import jax
import jax.numpy as jnp
from jax.experimental import pallas as pl
from jax.experimental.pallas import tpu as pltpu

_GELU_C = math.sqrt(2.0 / math.pi)
_GELU_C2 = _GELU_C * 0.044715


def _round_up(a, b):
    return (a + b - 1) // b * b


def _gelu_tanh(h):
    # nn.GELU(approximate='tanh'): 0.5*h*(1 + tanh(c*(h + 0.044715*h^3)))
    # refactored as 0.5*h*(1 + tanh(h*(c + c2*h*h))): one fewer VALU mul per
    # element; tanh lowers to the EUP (separate slot).  f32 throughout.
    return 0.5 * h * (1.0 + jnp.tanh(h * (_GELU_C + _GELU_C2 * (h * h))))


# ---------------------------------------------------------------------------
# Kernels
# ---------------------------------------------------------------------------

def _ffn_kernel_resident(x_ref, w1_ref, b1_ref, w2_ref, b2_ref, o_ref):
    # Whole weights VMEM-resident; one row tile of x in, one row tile of out.
    h = jnp.dot(x_ref[...], w1_ref[...], preferred_element_type=jnp.float32)
    h = _gelu_tanh(h + b1_ref[...])
    # Cast the activation back to the weight dtype so the second matmul stays
    # on the MXU fast (bf16) path with f32 accumulation.  Deliberate accuracy
    # trade-off vs an all-f32 reference (covered by the loosened tolerance).
    y = jnp.dot(h.astype(w2_ref.dtype), w2_ref[...],
                preferred_element_type=jnp.float32)
    o_ref[...] = (y + b2_ref[...]).astype(o_ref.dtype)


def _ffn_kernel_streamed(x_ref, w1_ref, b1_ref, w2_ref, b2_ref, o_ref, acc_ref):
    # Grid = (M tiles, H chunks).  W_fc column blocks / W_proj row blocks are
    # streamed over the "arbitrary" H axis; GELU applied per H chunk; partial
    # products accumulate into an f32 (TM, C) scratch.  Bounds VMEM for large
    # C/H (e.g. v7x's 64 MiB/TC) without a full (TM, H) intermediate.
    hi = pl.program_id(1)

    @pl.when(hi == 0)
    def _():
        acc_ref[...] = jnp.zeros_like(acc_ref)

    h = jnp.dot(x_ref[...], w1_ref[...], preferred_element_type=jnp.float32)
    h = _gelu_tanh(h + b1_ref[...])
    acc_ref[...] += jnp.dot(h.astype(w2_ref.dtype), w2_ref[...],
                            preferred_element_type=jnp.float32)

    @pl.when(hi == pl.num_programs(1) - 1)
    def _():
        o_ref[...] = (acc_ref[...] + b2_ref[...]).astype(o_ref.dtype)


# ---------------------------------------------------------------------------
# Sizing helpers
# ---------------------------------------------------------------------------

def _vmem_capacity_bytes():
    # Per-core VMEM capacity; conservative (v7x = 64 MiB/TC) fallback if the
    # hardware query is unavailable.
    try:
        cap = getattr(pltpu.get_tpu_info(), "vmem_capacity_bytes", None)
        if cap:
            return int(cap)
    except Exception:
        pass
    return 64 << 20


def _choose_tile_m(M, max_tile):
    m8 = _round_up(max(M, 1), 8)
    best_tm, best_score = 8, None
    for tm in (512, 384, 256, 128, 64, 32, 16, 8):
        if tm > m8 or tm > max_tile:
            continue
        m_pad = _round_up(M, tm)
        steps = m_pad // tm
        # cost ~ padded MXU rows + per-grid-step overhead (in "row equivalents")
        # + a penalty for grid==1 (would leave one v7x TensorCore idle).
        score = m_pad + 64 * steps + (256 if (steps == 1 and m8 > 8) else 0)
        if best_score is None or score < best_score:
            best_tm, best_score = tm, score
    return best_tm


def _choose_tile_h(h_pad):
    for th in (1024, 768, 512, 256):
        if h_pad % th == 0:
            return th
    return 256


def _resident_bytes(tile_m, c_pad, h_pad, x_dt, w_dt, out_dt):
    isz = lambda dt: jnp.dtype(dt).itemsize
    return (
        2 * c_pad * h_pad * isz(w_dt)                           # W_fc + W_proj (1 copy each)
        + (h_pad + c_pad) * 4                                    # f32 biases
        + tile_m * c_pad * (isz(x_dt) + isz(out_dt)) * 2         # x / out tiles, double-buffered
        + tile_m * h_pad * 4 * 4                                 # f32 h + GELU temps + bf16 copy
        + tile_m * c_pad * 4                                     # f32 y before cast
    )


def _streamed_bytes(tile_m, tile_h, c_pad, x_dt, w_dt, out_dt):
    isz = lambda dt: jnp.dtype(dt).itemsize
    return (
        tile_m * c_pad * (isz(x_dt) + isz(out_dt)) * 2           # x / out tiles
        + 2 * c_pad * tile_h * isz(w_dt) * 2                     # W_fc / W_proj blocks, double-buffered
        + (tile_h + c_pad) * 4 * 2                               # bias blocks
        + tile_m * c_pad * 4                                     # f32 accumulator scratch
        + tile_m * tile_h * 4 * 4                                # f32 h + GELU temps + bf16 copy
        + tile_m * c_pad * 4                                     # f32 partial product
    )


# ---------------------------------------------------------------------------
# pallas_call builders
# ---------------------------------------------------------------------------

def _make_resident_call(m_pad, c_pad, tile_m, out_dtype, vmem_limit):
    def vmem_resident():
        return pl.BlockSpec(memory_space=pltpu.MemorySpace.VMEM)

    return pl.pallas_call(
        _ffn_kernel_resident,
        out_shape=jax.ShapeDtypeStruct((m_pad, c_pad), out_dtype),
        grid_spec=pltpu.PrefetchScalarGridSpec(
            num_scalar_prefetch=0,
            grid=(m_pad // tile_m,),
            in_specs=[
                pl.BlockSpec((tile_m, c_pad), lambda i: (i, 0)),  # x row tile
                vmem_resident(),                                  # W_fc (one VMEM copy)
                vmem_resident(),                                  # b_fc
                vmem_resident(),                                  # W_proj
                vmem_resident(),                                  # b_proj
            ],
            out_specs=pl.BlockSpec((tile_m, c_pad), lambda i: (i, 0)),
        ),
        compiler_params=pltpu.CompilerParams(
            dimension_semantics=("parallel",),
            vmem_limit_bytes=vmem_limit,
        ),
    )


def _make_streamed_call(m_pad, c_pad, h_pad, tile_m, tile_h, out_dtype, vmem_limit):
    return pl.pallas_call(
        _ffn_kernel_streamed,
        out_shape=jax.ShapeDtypeStruct((m_pad, c_pad), out_dtype),
        grid_spec=pltpu.PrefetchScalarGridSpec(
            num_scalar_prefetch=0,
            grid=(m_pad // tile_m, h_pad // tile_h),
            in_specs=[
                pl.BlockSpec((tile_m, c_pad), lambda i, h: (i, 0)),  # x tile (H-invariant)
                pl.BlockSpec((c_pad, tile_h), lambda i, h: (0, h)),  # W_fc column block
                pl.BlockSpec((1, tile_h), lambda i, h: (0, h)),      # b_fc chunk
                pl.BlockSpec((tile_h, c_pad), lambda i, h: (h, 0)),  # W_proj row block
                pl.BlockSpec((1, c_pad), lambda i, h: (0, 0)),       # b_proj
            ],
            out_specs=pl.BlockSpec((tile_m, c_pad), lambda i, h: (i, 0)),
            scratch_shapes=[pltpu.VMEM((tile_m, c_pad), jnp.float32)],
        ),
        compiler_params=pltpu.CompilerParams(
            dimension_semantics=("parallel", "arbitrary"),
            vmem_limit_bytes=vmem_limit,
        ),
    )


# ---------------------------------------------------------------------------
# Public wrapper
# ---------------------------------------------------------------------------

def ffn_pallas(x, w_fc, b_fc, w_proj, b_proj, *, force_streamed=False,
               tile_h_override=None):
    """x: (B, T, C).  w_fc: (C, 4C), b_fc: (4C,), w_proj: (4C, C), b_proj: (C,).

    Weights are stored pre-transposed as (in_features, out_features) so the
    kernel performs plain row-major matmuls (same math as the PyTorch Linears).
    """
    B, T, C = x.shape
    H = w_fc.shape[1]
    M = B * T
    out_dtype = x.dtype

    vmem_cap = _vmem_capacity_bytes()
    budget = max(vmem_cap - (8 << 20), 16 << 20)  # headroom for Mosaic scratch

    # 256-aligned feature dims: full 256x256 MXU passes (v6e/v7x) and
    # lane-dense unmasked stores.  GPT-2 dims (768/3072) are already aligned.
    c_pad = _round_up(C, 256)
    h_pad = _round_up(H, 256)

    # Row tile: big for MXU occupancy, chosen to minimize padding and keep
    # >= 2 grid steps (v7x megacore); capped at 256 on 64 MiB/TC parts.
    max_tile_m = 256 if vmem_cap <= (64 << 20) else 512
    tile_m = _choose_tile_m(M, max_tile_m)

    # Prefer fully VMEM-resident weights (no HBM re-fetch per row tile); shrink
    # the row tile before giving up and falling back to H-streaming.
    use_resident = False
    resident_est = 0
    if not force_streamed:
        tm = tile_m
        while True:
            est = _resident_bytes(tm, c_pad, h_pad, x.dtype, w_fc.dtype, out_dtype)
            if int(est * 1.2) + (2 << 20) <= budget:
                tile_m, resident_est, use_resident = tm, est, True
                break
            if tm <= 64:
                break
            tm //= 2

    if use_resident:
        vmem_limit = min(max(int(resident_est * 1.25) + (4 << 20), 32 << 20), budget)
        tile_h = None
    else:
        tile_h = tile_h_override or _choose_tile_h(h_pad)
        while (int(_streamed_bytes(tile_m, tile_h, c_pad, x.dtype, w_fc.dtype,
                                   out_dtype) * 1.2) + (2 << 20) > budget):
            if tile_h > 256:
                tile_h = 256
            elif tile_m > 16:
                tile_m = max(16, tile_m // 2)
            else:
                break
        est = _streamed_bytes(tile_m, tile_h, c_pad, x.dtype, w_fc.dtype, out_dtype)
        vmem_limit = min(max(int(est * 1.25) + (4 << 20), 32 << 20), budget)

    m_pad = _round_up(M, tile_m)

    x2 = x.reshape(M, C)
    if (m_pad, c_pad) != (M, C):
        x2 = jnp.pad(x2, ((0, m_pad - M), (0, c_pad - C)))
    w1 = jnp.pad(w_fc, ((0, c_pad - C), (0, h_pad - H)))
    w2 = jnp.pad(w_proj, ((0, h_pad - H), (0, c_pad - C)))
    # Biases stay f32 (tiny) so bias add + GELU run in f32 without casts.
    b1 = jnp.pad(b_fc.astype(jnp.float32), (0, h_pad - H)).reshape(1, h_pad)
    b2 = jnp.pad(b_proj.astype(jnp.float32), (0, c_pad - C)).reshape(1, c_pad)

    # TODO(synk): optional fp8 weight path on v7x (halves resident weight VMEM
    # and ~2x MXU throughput) for models that tolerate the quantization.

    if use_resident:
        call = _make_resident_call(m_pad, c_pad, tile_m, out_dtype, vmem_limit)
    else:
        call = _make_streamed_call(m_pad, c_pad, h_pad, tile_m, tile_h,
                                   out_dtype, vmem_limit)
    out = call(x2, w1, b1, w2, b2)

    return out[:M, :C].reshape(B, T, C)


def ffn_reference(x, w_fc, b_fc, w_proj, b_proj):
    h = x @ w_fc + b_fc
    h = jax.nn.gelu(h, approximate=True)
    return h @ w_proj + b_proj


if __name__ == "__main__":
    # Small GPT-2-like config: n_embd=32, hidden=4*32=128, batch=2, seq=8.
    B, T, C = 2, 8, 32
    H = 4 * C

    key = jax.random.PRNGKey(0)
    k_x, k_w1, k_b1, k_w2, k_b2 = jax.random.split(key, 5)

    # bf16 activations/weights (MXU fast path), f32 biases; deterministic init.
    x = jax.random.normal(k_x, (B, T, C), dtype=jnp.float32).astype(jnp.bfloat16)
    w_fc = (jax.random.normal(k_w1, (C, H), dtype=jnp.float32)
            * 0.02).astype(jnp.bfloat16)
    b_fc = jax.random.normal(k_b1, (H,), dtype=jnp.float32) * 0.02
    w_proj = (jax.random.normal(k_w2, (H, C), dtype=jnp.float32)
              * (0.02 / math.sqrt(2.0))).astype(jnp.bfloat16)
    b_proj = jax.random.normal(k_b2, (C,), dtype=jnp.float32) * 0.02

    out = ffn_pallas(x, w_fc, b_fc, w_proj, b_proj)
    out = jax.block_until_ready(out)

    ref = ffn_reference(x.astype(jnp.float32), w_fc.astype(jnp.float32), b_fc,
                        w_proj.astype(jnp.float32), b_proj)
    assert out.shape == (B, T, C)
    assert out.dtype == x.dtype
    max_err = float(jnp.max(jnp.abs(out.astype(jnp.float32) - ref)))
    # bf16 matmul inputs with f32 accumulation: tolerance loosened vs f32 ref.
    assert max_err < 2e-2, f"resident path mismatch: max abs err {max_err}"

    # Also exercise the H-streaming accumulator path (the one used when the
    # weights don't fit VMEM, e.g. large C on v7x's 64 MiB/TC) on a small
    # shape, forcing 2 H-chunks so the pl.when init/accumulate/finalize runs.
    B2, T2, C2 = 1, 16, 128
    H2 = 4 * C2
    k_x2, k_w12, k_b12, k_w22, k_b22 = jax.random.split(jax.random.PRNGKey(1), 5)
    x_s = jax.random.normal(k_x2, (B2, T2, C2), dtype=jnp.float32).astype(jnp.bfloat16)
    w_fc_s = (jax.random.normal(k_w12, (C2, H2), dtype=jnp.float32)
              * 0.02).astype(jnp.bfloat16)
    b_fc_s = jax.random.normal(k_b12, (H2,), dtype=jnp.float32) * 0.02
    w_proj_s = (jax.random.normal(k_w22, (H2, C2), dtype=jnp.float32)
                * (0.02 / math.sqrt(2.0))).astype(jnp.bfloat16)
    b_proj_s = jax.random.normal(k_b22, (C2,), dtype=jnp.float32) * 0.02

    out_s = ffn_pallas(x_s, w_fc_s, b_fc_s, w_proj_s, b_proj_s,
                       force_streamed=True, tile_h_override=256)
    out_s = jax.block_until_ready(out_s)
    ref_s = ffn_reference(x_s.astype(jnp.float32), w_fc_s.astype(jnp.float32),
                          b_fc_s, w_proj_s.astype(jnp.float32), b_proj_s)
    max_err_s = float(jnp.max(jnp.abs(out_s.astype(jnp.float32) - ref_s)))
    assert out_s.shape == (B2, T2, C2) and out_s.dtype == x_s.dtype
    assert max_err_s < 2e-2, f"streamed path mismatch: max abs err {max_err_s}"

    print("KERNEL_OK")
</pallas_src>

<mosaic_0001>
module attributes {stable_mosaic.version = 11 : i64} {
  func.func @_ffn_kernel_resident(%arg0: i32, %arg1: memref<8x256xbf16, #tpu.memory_space<vmem>>, %arg2: memref<256x256xbf16, #tpu.memory_space<vmem>>, %arg3: memref<1x256xf32, #tpu.memory_space<vmem>>, %arg4: memref<256x256xbf16, #tpu.memory_space<vmem>>, %arg5: memref<1x256xf32, #tpu.memory_space<vmem>>, %arg6: memref<8x256xbf16, #tpu.memory_space<vmem>>) attributes {dimension_semantics = [#tpu.dimension_semantics<parallel>], iteration_bounds = array<i64: 2>, scalar_prefetch = 0 : i64, scratch_operands = 0 : i64, tpu.core_type = #tpu.core_type<tc>, window_params = [{transform_indices = @transform_0, window_bounds = array<i64: 8, 256>}, {pipeline_mode = #tpu.pipeline_mode<synchronous>, transform_indices = @transform_1, window_bounds = array<i64: 256, 256>}, {pipeline_mode = #tpu.pipeline_mode<synchronous>, transform_indices = @transform_2, window_bounds = array<i64: 1, 256>}, {pipeline_mode = #tpu.pipeline_mode<synchronous>, transform_indices = @transform_3, window_bounds = array<i64: 256, 256>}, {pipeline_mode = #tpu.pipeline_mode<synchronous>, transform_indices = @transform_4, window_bounds = array<i64: 1, 256>}, {transform_indices = @transform_5, window_bounds = array<i64: 8, 256>}]} {
    %c0 = arith.constant 0 : index
    %c0_0 = arith.constant 0 : index
    %0 = vector.load %arg1[%c0, %c0_0] : memref<8x256xbf16, #tpu.memory_space<vmem>>, vector<8x256xbf16>
    %c0_1 = arith.constant 0 : index
    %c0_2 = arith.constant 0 : index
    %1 = vector.load %arg2[%c0_1, %c0_2] : memref<256x256xbf16, #tpu.memory_space<vmem>>, vector<256x256xbf16>
    %cst = arith.constant dense<0.000000e+00> : vector<8x256xf32>
    %2 = tpu.matmul %0, %1, %cst {dimension_numbers = #tpu.dot_dimension_numbers<[1], [0], [0], [1], [0, 0, 1, 1], [], []>} : vector<8x256xbf16>, vector<256x256xbf16>, vector<8x256xf32> -> vector<8x256xf32>
    %c0_3 = arith.constant 0 : index
    %c0_4 = arith.constant 0 : index
    %3 = vector.load %arg3[%c0_3, %c0_4] : memref<1x256xf32, #tpu.memory_space<vmem>>, vector<1x256xf32>
    %4 = vector.broadcast %3 : vector<1x256xf32> to vector<8x256xf32>
    %5 = arith.addf %2, %4 : vector<8x256xf32>
    %cst_5 = arith.constant 5.000000e-01 : f32
    %6 = vector.broadcast %cst_5 : f32 to vector<8x256xf32>
    %7 = arith.mulf %6, %5 : vector<8x256xf32>
    %8 = arith.mulf %5, %5 : vector<8x256xf32>
    %cst_6 = arith.constant 0.0356774069 : f32
    %9 = vector.broadcast %cst_6 : f32 to vector<8x256xf32>
    %10 = arith.mulf %9, %8 : vector<8x256xf32>
    %cst_7 = arith.constant 0.797884583 : f32
    %11 = vector.broadcast %cst_7 : f32 to vector<8x256xf32>
    %12 = arith.addf %11, %10 : vector<8x256xf32>
    %13 = arith.mulf %5, %12 : vector<8x256xf32>
    %14 = math.tanh %13 : vector<8x256xf32>
    %cst_8 = arith.constant 1.000000e+00 : f32
    %15 = vector.broadcast %cst_8 : f32 to vector<8x256xf32>
    %16 = arith.addf %15, %14 : vector<8x256xf32>
    %17 = arith.mulf %7, %16 : vector<8x256xf32>
    %18 = arith.truncf %17 : vector<8x256xf32> to vector<8x256xbf16>
    %c0_9 = arith.constant 0 : index
    %c0_10 = arith.constant 0 : index
    %19 = vector.load %arg4[%c0_9, %c0_10] : memref<256x256xbf16, #tpu.memory_space<vmem>>, vector<256x256xbf16>
    %cst_11 = arith.constant dense<0.000000e+00> : vector<8x256xf32>
    %20 = tpu.matmul %18, %19, %cst_11 {dimension_numbers = #tpu.dot_dimension_numbers<[1], [0], [0], [1], [0, 0, 1, 1], [], []>} : vector<8x256xbf16>, vector<256x256xbf16>, vector<8x256xf32> -> vector<8x256xf32>
    %c0_12 = arith.constant 0 : index
    %c0_13 = arith.constant 0 : index
    %21 = vector.load %arg5[%c0_12, %c0_13] : memref<1x256xf32, #tpu.memory_space<vmem>>, vector<1x256xf32>
    %22 = vector.broadcast %21 : vector<1x256xf32> to vector<8x256xf32>
    %23 = arith.addf %20, %22 : vector<8x256xf32>
    %24 = arith.truncf %23 : vector<8x256xf32> to vector<8x256xbf16>
    %c0_14 = arith.constant 0 : index
    %c0_15 = arith.constant 0 : index
    %25 = vector.load %arg6[%c0_14, %c0_15] : memref<8x256xbf16, #tpu.memory_space<vmem>>, vector<8x256xbf16>
    tpu.vector_store %arg6[%c0_14, %c0_15], %24 {strides = array<i32>} : memref<8x256xbf16, #tpu.memory_space<vmem>>, vector<8x256xbf16>,
    return
  }
  func.func @transform_0(%arg0: i32) -> (i32, i32) {
    %c0_i32 = arith.constant 0 : i32
    %c0_i32_0 = arith.constant 0 : i32
    return %arg0, %c0_i32 : i32, i32
  }
  func.func @transform_1(%arg0: i32) -> (i32, i32) {
    %c0_i32 = arith.constant 0 : i32
    %c0_i32_0 = arith.constant 0 : i32
    %c0_i32_1 = arith.constant 0 : i32
    return %c0_i32, %c0_i32_0 : i32, i32
  }
  func.func @transform_2(%arg0: i32) -> (i32, i32) {
    %c0_i32 = arith.constant 0 : i32
    %c0_i32_0 = arith.constant 0 : i32
    %c0_i32_1 = arith.constant 0 : i32
    return %c0_i32, %c0_i32_0 : i32, i32
  }
  func.func @transform_3(%arg0: i32) -> (i32, i32) {
    %c0_i32 = arith.constant 0 : i32
    %c0_i32_0 = arith.constant 0 : i32
    %c0_i32_1 = arith.constant 0 : i32
    return %c0_i32, %c0_i32_0 : i32, i32
  }
  func.func @transform_4(%arg0: i32) -> (i32, i32) {
    %c0_i32 = arith.constant 0 : i32
    %c0_i32_0 = arith.constant 0 : i32
    %c0_i32_1 = arith.constant 0 : i32
    return %c0_i32, %c0_i32_0 : i32, i32
  }
  func.func @transform_5(%arg0: i32) -> (i32, i32) {
    %c0_i32 = arith.constant 0 : i32
    %c0_i32_0 = arith.constant 0 : i32
    return %arg0, %c0_i32 : i32, i32
  }
}

</mosaic_0001>

<llo_original>
// kernel: tpu_custom_call.1
$region0: #{tpu_custom_call.1}
  #allocation0 [shape = 'u32[]', space=smem, size = 0x4, offset = 0x4, fixed_abs, tag = 'smem constant byte address 0x4 - core index']
  #allocation1 [shape = 'u32[72,128]{1,0:T(1,128)}', space=vmem, size = 0x9000, scoped, tag = 'internal scratch']
  %s0 = inlined_call_operand.hbm [shape: bf16[16,256], index: 0, kind: input, shape index: {}]
  %s1 = inlined_call_operand.hbm [shape: bf16[256,256], index: 1, kind: input, shape index: {}]
  %s2 = inlined_call_operand.hbm [shape: f32[1,256], index: 2, kind: input, shape index: {}]
  %s3 = inlined_call_operand.hbm [shape: bf16[256,256], index: 3, kind: input, shape index: {}]
  %s4 = inlined_call_operand.vmem [shape: f32[1,256], index: 4, kind: input, shape index: {}]
  %s5 = inlined_call_operand.hbm [shape: bf16[16,256], index: 5, kind: output, shape index: {}]
  %s6 = sld [smem:[#allocation0]]
  $region69: #{tpu_custom_call.1} parent=0
    _
  %s8 = ssub.s32 1, %s6
  %s9 = scalar_select 0, %s8, %s6
  $region1: #{tpu_custom_call.1} parent=0
    #allocation2 [shape = 'u8[8192]{0}', space=vmem, size = 0x2000, scoped, tag = 'input window, operand 0']
    #allocation3 [shape = 's32[2]{0}', space=sflag, size = 0x8, scoped, tag = 'scoped memory for tpu_custom_call.1']
    #allocation4 [shape = 's32[2]{0}', space=sflag, size = 0x8, scoped, tag = 'scoped memory for tpu_custom_call.1']
    #allocation5 [shape = 'u8[131072]{0}', space=vmem, size = 0x20000, scoped, tag = 'input window, operand 1, single buffered']
    #allocation6 [shape = 's32[1]{0}', space=sflag, size = 0x4, scoped, tag = 'scoped memory for tpu_custom_call.1']
    #allocation7 [shape = 'u8[1024]{0}', space=vmem, size = 0x400, scoped, tag = 'input window, operand 2, single buffered']
    #allocation8 [shape = 'u8[131072]{0}', space=vmem, size = 0x20000, scoped, tag = 'input window, operand 3, single buffered']
    #allocation9 [shape = 's32[1]{0}', space=sflag, size = 0x4, scoped, tag = 'scoped memory for tpu_custom_call.1']
    #allocation10 [shape = 'u8[8192]{0}', space=vmem, size = 0x2000, scoped, tag = 'output window, operand 0']
    %10 = vsyncpa [#allocation3], 0
    %s11 = scalar_lea.sflag [#allocation3], 1
    %12 = vsyncpa %s11, 0
    %13 = vsyncpa [#allocation6], 0
    %14 = vsyncpa [#allocation9], 0
    %15 = vsyncpa [#allocation4], 0
    %s16 = scalar_lea.sflag [#allocation4], 1
    %17 = vsyncpa %s16, 0
    loop: start=0, step=1, limit=4
    $region2: #{tpu_custom_call.1} parent=1 // loop_pre_header
      _
    $region3: #{tpu_custom_call.1} parent=1 // loop_header
      %s19 = sphi 0, %s23
      %p20 = scmp.ge.s32.totalorder %s19, 4
      %s29 = sphi 0, %s31
      %s32 = sphi 0, %s29
      %s33 = sphi 0, %s32
      %s49 = sphi 0, %s33
      %s53 = sphi 0, %s53
      %s55 = sphi 0, %s53
      %s56 = sphi 0, %s55
      %s70 = sphi 0, %s56
      %s74 = sphi 0, %s74
      %s76 = sphi 0, %s74
      %s77 = sphi 0, %s76
      %s91 = sphi 0, %s77
      %s95 = sphi 0, %s95
      %s97 = sphi 0, %s95
      %s98 = sphi 0, %s97
      %s112 = sphi 0, %s98
      %s116 = sphi 0, %s116
      %s118 = sphi 0, %s116
      %s119 = sphi 0, %s118
      %s133 = sphi 0, %s119
      %s139 = sphi 0, %s141
      %s142 = sphi 0, %s139
      %s143 = sphi 0, %s142
      %s159 = sphi 0, %s143
    $region4: #{tpu_custom_call.1} parent=1 // loop_header_branch
      %22 = sbr.rel (%p20) target = $region8
    $region5: #{tpu_custom_call.1} parent=1 // loop_body
      %s24 = ssub.s32 %s19, 1
      %s25 = ssub.s32 %s19, 2
      %s26 = sadd.s32 %s19, 1
      %s27 = ssub.s32 %s19, %s26
      %p28 = scmp.eq.s32.totalorder %s27, 0
      %s30 = sadd.s32 %s29, 1
      %s31 = scalar_select %p28, %s29, %s30
      %p34 = pneg %p28
      %p35 = scmp.eq.s32.totalorder %s19, 1
      %p36 = por %p34, %p35
      %p37 = scmp.ne.s32.totalorder %s29, %s32
      %p38 = scmp.eq.s32.totalorder %s19, 0
      %p39 = por %p37, %p38
      %p40 = scmp.ne.s32.totalorder %s29, %s32
      %p41 = scmp.eq.s32.totalorder %s24, 1
      %p42 = por %p40, %p41
      %p43 = scmp.ne.s32.totalorder %s32, %s33
      %p44 = scmp.eq.s32.totalorder %s24, 0
      %p45 = por %p43, %p44
      %p46 = scmp.ne.s32.totalorder %s32, %s33
      %p47 = scmp.eq.s32.totalorder %s25, 1
      %p48 = por %p46, %p47
      %p50 = scmp.ne.s32.totalorder %s33, %s49
      %p51 = scmp.eq.s32.totalorder %s25, 0
      %p52 = por %p50, %p51
      %s54 = sadd.s32 %s53, 1
      %p57 = scmp.eq.s32.totalorder %s19, 1
      %p58 = scmp.ne.s32.totalorder %s53, %s55
      %p59 = scmp.eq.s32.totalorder %s19, 0
      %p60 = por %p58, %p59
      %p61 = scmp.ne.s32.totalorder %s53, %s55
      %p62 = scmp.eq.s32.totalorder %s24, 1
      %p63 = por %p61, %p62
      %p64 = scmp.ne.s32.totalorder %s55, %s56
      %p65 = scmp.eq.s32.totalorder %s24, 0
      %p66 = por %p64, %p65
      %p67 = scmp.ne.s32.totalorder %s55, %s56
      %p68 = scmp.eq.s32.totalorder %s25, 1
      %p69 = por %p67, %p68
      %p71 = scmp.ne.s32.totalorder %s56, %s70
      %p72 = scmp.eq.s32.totalorder %s25, 0
      %p73 = por %p71, %p72
      %s75 = sadd.s32 %s74, 1
      %p78 = scmp.eq.s32.totalorder %s19, 1
      %p79 = scmp.ne.s32.totalorder %s74, %s76
      %p80 = scmp.eq.s32.totalorder %s19, 0
      %p81 = por %p79, %p80
      %p82 = scmp.ne.s32.totalorder %s74, %s76
      %p83 = scmp.eq.s32.totalorder %s24, 1
      %p84 = por %p82, %p83
      %p85 = scmp.ne.s32.totalorder %s76, %s77
      %p86 = scmp.eq.s32.totalorder %s24, 0
      %p87 = por %p85, %p86
      %p88 = scmp.ne.s32.totalorder %s76, %s77
      %p89 = scmp.eq.s32.totalorder %s25, 1
      %p90 = por %p88, %p89
      %p92 = scmp.ne.s32.totalorder %s77, %s91
      %p93 = scmp.eq.s32.totalorder %s25, 0
      %p94 = por %p92, %p93
      %s96 = sadd.s32 %s95, 1
      %p99 = scmp.eq.s32.totalorder %s19, 1
      %p100 = scmp.ne.s32.totalorder %s95, %s97
      %p101 = scmp.eq.s32.totalorder %s19, 0
      %p102 = por %p100, %p101
      %p103 = scmp.ne.s32.totalorder %s95, %s97
      %p104 = scmp.eq.s32.totalorder %s24, 1
      %p105 = por %p103, %p104
      %p106 = scmp.ne.s32.totalorder %s97, %s98
      %p107 = scmp.eq.s32.totalorder %s24, 0
      %p108 = por %p106, %p107
      %p109 = scmp.ne.s32.totalorder %s97, %s98
      %p110 = scmp.eq.s32.totalorder %s25, 1
      %p111 = por %p109, %p110
      %p113 = scmp.ne.s32.totalorder %s98, %s112
      %p114 = scmp.eq.s32.totalorder %s25, 0
      %p115 = por %p113, %p114
      %s117 = sadd.s32 %s116, 1
      %p120 = scmp.eq.s32.totalorder %s19, 1
      %p121 = scmp.ne.s32.totalorder %s116, %s118
      %p122 = scmp.eq.s32.totalorder %s19, 0
      %p123 = por %p121, %p122
      %p124 = scmp.ne.s32.totalorder %s116, %s118
      %p125 = scmp.eq.s32.totalorder %s24, 1
      %p126 = por %p124, %p125
      %p127 = scmp.ne.s32.totalorder %s118, %s119
      %p128 = scmp.eq.s32.totalorder %s24, 0
      %p129 = por %p127, %p128
      %p130 = scmp.ne.s32.totalorder %s118, %s119
      %p131 = scmp.eq.s32.totalorder %s25, 1
      %p132 = por %p130, %p131
      %p134 = scmp.ne.s32.totalorder %s119, %s133
      %p135 = scmp.eq.s32.totalorder %s25, 0
      %p136 = por %p134, %p135
      %s137 = ssub.s32 %s19, %s26
      %p138 = scmp.eq.s32.totalorder %s137, 0
      %s140 = sadd.s32 %s139, 1
      %s141 = scalar_select %p138, %s139, %s140
      %p144 = pneg %p138
      %p145 = scmp.eq.s32.totalorder %s19, 1
      %p146 = por %p144, %p145
      %p147 = scmp.ne.s32.totalorder %s139, %s142
      %p148 = scmp.eq.s32.totalorder %s19, 0
      %p149 = por %p147, %p148
      %p150 = scmp.ne.s32.totalorder %s139, %s142
      %p151 = scmp.eq.s32.totalorder %s24, 1
      %p152 = por %p150, %p151
      %p153 = scmp.ne.s32.totalorder %s142, %s143
      %p154 = scmp.eq.s32.totalorder %s24, 0
      %p155 = por %p153, %p154
      %p156 = scmp.ne.s32.totalorder %s142, %s143
      %p157 = scmp.eq.s32.totalorder %s25, 1
      %p158 = por %p156, %p157
      %p160 = scmp.ne.s32.totalorder %s143, %s159
      %p161 = scmp.eq.s32.totalorder %s25, 0
      %p162 = por %p160, %p161
      %p163 = scmp.le.s32.totalorder 1, %s19
      %p164 = scmp.lt.s32.totalorder %s19, 3
      %p165 = pnand %p163, %p164
      %p166 = pneg %p165
      // Predicated region
      $region9: #{tpu_custom_call.1} parent=5 // pred_check
        _
      $region10: #{tpu_custom_call.1} parent=5 // pred_check_branch
        %168 = sbr.rel (%p165) target = $region12
      $region11: #{tpu_custom_call.1} parent=5 // pred_region
        %s169 = ssub.s32 %s19, 1
        // Predicated region
        $region13: #{tpu_custom_call.1} parent=11 // pred_check
          %p170 = pneg %p66
        $region14: #{tpu_custom_call.1} parent=11 // pred_check_branch
          %172 = sbr.rel (%p170) target = $region16
        $region15: #{tpu_custom_call.1} parent=11 // pred_region
          %174 = vsyncadd [#allocation6], 0
          %s175 = sshll.u32 %s1, 4
          %s176 = int_to_ptr.hbm [resolvable:$true] %s175
          %s177 = sshll.u32 [#allocation5], 4
          %s178 = int_to_ptr.vmem [resolvable:$true] %s177
          %183 = dma.hbm_to_vmem [thread:$0]  %s176, 4096, %s178, [#allocation6], 128, 128, 8
        $region16: #{tpu_custom_call.1} parent=11 // pred_fallthru
          _
        // Predicated region
        $region17: #{tpu_custom_call.1} parent=11 // pred_check
          %p184 = pneg %p87
        $region18: #{tpu_custom_call.1} parent=11 // pred_check_branch
          %186 = sbr.rel (%p184) target = $region20
        $region19: #{tpu_custom_call.1} parent=11 // pred_region
          %188 = vsyncadd [#allocation6], 0
          %s190 = sshll.u32 %s2, 4
          %s191 = int_to_ptr.hbm [resolvable:$true] %s190
          %s192 = sshll.u32 [#allocation7], 4
          %s193 = int_to_ptr.vmem [resolvable:$true] %s192
          %195 = dma.hbm_to_vmem [thread:$0]  %s191, 32, %s193, [#allocation6]
        $region20: #{tpu_custom_call.1} parent=11 // pred_fallthru
          _
        // Predicated region
        $region21: #{tpu_custom_call.1} parent=11 // pred_check
          %p196 = pneg %p108
        $region22: #{tpu_custom_call.1} parent=11 // pred_check_branch
          %198 = sbr.rel (%p196) target = $region24
        $region23: #{tpu_custom_call.1} parent=11 // pred_region
          %200 = vsyncadd [#allocation9], 0
          %s201 = sshll.u32 %s3, 4
          %s202 = int_to_ptr.hbm [resolvable:$true] %s201
          %s203 = sshll.u32 [#allocation8], 4
          %s204 = int_to_ptr.vmem [resolvable:$true] %s203
          %209 = dma.hbm_to_vmem [thread:$0]  %s202, 4096, %s204, [#allocation9], 128, 128, 8
        $region24: #{tpu_custom_call.1} parent=11 // pred_fallthru
          _
        // Predicated region
        $region25: #{tpu_custom_call.1} parent=11 // pred_check
          %p210 = pneg %p129
        $region26: #{tpu_custom_call.1} parent=11 // pred_check_branch
          %212 = sbr.rel (%p210) target = $region28
        $region27: #{tpu_custom_call.1} parent=11 // pred_region
          _
        $region28: #{tpu_custom_call.1} parent=11 // pred_fallthru
          _
      $region12: #{tpu_custom_call.1} parent=5 // pred_fallthru
        _
      %p213 = scmp.lt.s32.totalorder %s19, 2
      // Predicated region
      $region29: #{tpu_custom_call.1} parent=5 // pred_check
        %p214 = pneg %p213
      $region30: #{tpu_custom_call.1} parent=5 // pred_check_branch
        %216 = sbr.rel (%p214) target = $region32
      $region31: #{tpu_custom_call.1} parent=5 // pred_region
        // Predicated region
        $region33: #{tpu_custom_call.1} parent=31 // pred_check
          %p217 = pneg %p39
        $region34: #{tpu_custom_call.1} parent=31 // pred_check_branch
          %219 = sbr.rel (%p217) target = $region36
        $region35: #{tpu_custom_call.1} parent=31 // pred_region
          %s220 = sand.u32 %s29, 1
          %s221 = scalar_lea.sflag [#allocation3], %s220
          %s222 = sand.u32 %s29, 1
          %s223 = smul.addr %s222, 8
          %s224 = scalar_lea.vmem [#allocation2], %s223
          %226 = vsyncadd %s221, 0
          %s227 = smul.addr %s19, 2
          %s228 = smul.addr %s227, 4
          %s229 = scalar_lea.hbm %s0, %s228
          %s231 = sshll.u32 %s229, 4
          %s232 = int_to_ptr.hbm [resolvable:$true] %s231
          %s233 = sshll.u32 %s224, 4
          %s234 = int_to_ptr.vmem [resolvable:$true] %s233
          %236 = dma.hbm_to_vmem [thread:$0]  %s232, 128, %s234, %s221
        $region36: #{tpu_custom_call.1} parent=31 // pred_fallthru
          _
      $region32: #{tpu_custom_call.1} parent=5 // pred_fallthru
        _
      %p237 = scmp.le.s32.totalorder 1, %s19
      %p238 = scmp.lt.s32.totalorder %s19, 3
      %p239 = pnand %p237, %p238
      %p240 = pneg %p239
      // Predicated region
      $region37: #{tpu_custom_call.1} parent=5 // pred_check
        _
      $region38: #{tpu_custom_call.1} parent=5 // pred_check_branch
        %242 = sbr.rel (%p239) target = $region40
      $region39: #{tpu_custom_call.1} parent=5 // pred_region
        %s243 = ssub.s32 %s19, 1
        %s244 = sand.u32 %s32, 1
        %s245 = scalar_lea.sflag [#allocation3], %s244
        %s246 = sand.u32 %s32, 1
        %s247 = smul.addr %s246, 8
        %s248 = scalar_lea.vmem [#allocation2], %s247
        // Predicated region
        $region41: #{tpu_custom_call.1} parent=39 // pred_check
          %p249 = pneg %p45
        $region42: #{tpu_custom_call.1} parent=39 // pred_check_branch
          %251 = sbr.rel (%p249) target = $region44
        $region43: #{tpu_custom_call.1} parent=39 // pred_region
          %253 = dma.done %s245, 128
        $region44: #{tpu_custom_call.1} parent=39 // pred_fallthru
          _
        // Predicated region
        $region45: #{tpu_custom_call.1} parent=39 // pred_check
          %p254 = pneg %p66
        $region46: #{tpu_custom_call.1} parent=39 // pred_check_branch
          %256 = sbr.rel (%p254) target = $region48
        $region47: #{tpu_custom_call.1} parent=39 // pred_region
          %258 = dma.done [#allocation6], 4096
        $region48: #{tpu_custom_call.1} parent=39 // pred_fallthru
          _
        // Predicated region
        $region49: #{tpu_custom_call.1} parent=39 // pred_check
          %p259 = pneg %p87
        $region50: #{tpu_custom_call.1} parent=39 // pred_check_branch
          %261 = sbr.rel (%p259) target = $region52
        $region51: #{tpu_custom_call.1} parent=39 // pred_region
          %263 = dma.done [#allocation6], 32
        $region52: #{tpu_custom_call.1} parent=39 // pred_fallthru
          _
        // Predicated region
        $region53: #{tpu_custom_call.1} parent=39 // pred_check
          %p264 = pneg %p108
        $region54: #{tpu_custom_call.1} parent=39 // pred_check_branch
          %266 = sbr.rel (%p264) target = $region56
        $region55: #{tpu_custom_call.1} parent=39 // pred_region
          %268 = dma.done [#allocation9], 4096
        $region56: #{tpu_custom_call.1} parent=39 // pred_fallthru
          _
        %s269 = sand.u32 %s32, 1
        %s270 = scalar_lea.sflag [#allocation3], %s269
        %s271 = sand.u32 %s32, 1
        %s272 = smul.addr %s271, 8
        %s273 = scalar_lea.vmem [#allocation2], %s272
        %p274 = pneg %p45
        %p275 = pneg %p42
        %p276 = pneg %p66
        %p277 = pneg %p63
        %p278 = pneg %p87
        %p279 = pneg %p84
        %p280 = pneg %p108
        %p281 = pneg %p105
        %p282 = pneg %p129
        %p283 = pneg %p126
        %p284 = pneg %p155
        %p285 = pneg %p152
        %s286 = sand.u32 %s142, 1
        %s287 = scalar_lea.sflag [#allocation4], %s286
        %s288 = sand.u32 %s142, 1
        %s289 = smul.addr %s288, 8
        %s290 = scalar_lea.vmem [#allocation10], %s289
        %v291 = vld [vmem:[%s248] sm:$0xff]
        %v292 = vld [vmem:[#allocation5] sm:$0xff]
        %v293 = vld [vmem:[#allocation5 + $0x8] sm:$0xff]
        %v294 = vld [vmem:[#allocation5 + $0x10] sm:$0xff]
        %v295 = vld [vmem:[#allocation5 + $0x18] sm:$0xff]
        %v296 = vld [vmem:[#allocation5 + $0x20] sm:$0xff]
        %v297 = vld [vmem:[#allocation5 + $0x28] sm:$0xff]
        %v298 = vld [vmem:[#allocation5 + $0x30] sm:$0xff]
        %v299 = vld [vmem:[#allocation5 + $0x38] sm:$0xff]
        %v300 = vld [vmem:[#allocation5 + $0x40] sm:$0xff]
        %v301 = vld [vmem:[#allocation5 + $0x48] sm:$0xff]
        %v302 = vld [vmem:[#allocation5 + $0x50] sm:$0xff]
        %v303 = vld [vmem:[#allocation5 + $0x58] sm:$0xff]
        %v304 = vld [vmem:[#allocation5 + $0x60] sm:$0xff]
        %v305 = vld [vmem:[#allocation5 + $0x68] sm:$0xff]
        %v306 = vld [vmem:[#allocation5 + $0x70] sm:$0xff]
        %v307 = vld [vmem:[#allocation5 + $0x78] sm:$0xff]
        %v308 = vld [vmem:[#allocation5 + $0x80] sm:$0xff]
        %v309 = vld [vmem:[#allocation5 + $0x88] sm:$0xff]
        %v310 = vld [vmem:[#allocation5 + $0x90] sm:$0xff]
        %v311 = vld [vmem:[#allocation5 + $0x98] sm:$0xff]
        %v312 = vld [vmem:[#allocation5 + $0xa0] sm:$0xff]
        %v313 = vld [vmem:[#allocation5 + $0xa8] sm:$0xff]
        %v314 = vld [vmem:[#allocation5 + $0xb0] sm:$0xff]
        %v315 = vld [vmem:[#allocation5 + $0xb8] sm:$0xff]
        %v316 = vld [vmem:[#allocation5 + $0xc0] sm:$0xff]
        %v317 = vld [vmem:[#allocation5 + $0xc8] sm:$0xff]
        %v318 = vld [vmem:[#allocation5 + $0xd0] sm:$0xff]
        %v319 = vld [vmem:[#allocation5 + $0xd8] sm:$0xff]
        %v320 = vld [vmem:[#allocation5 + $0xe0] sm:$0xff]
        %v321 = vld [vmem:[#allocation5 + $0xe8] sm:$0xff]
        %v322 = vld [vmem:[#allocation5 + $0xf0] sm:$0xff]
        %v323 = vld [vmem:[#allocation5 + $0xf8] sm:$0xff]
        %v324 = vld [vmem:[#allocation7] sm:$0x3]
        %v326 = vperm.slane %v324, 0
        %v327 = vperm.slane %v324, 1
        %v331 = vunpack.c.l.b16 %v291
        %v332 = vunpack.c.h.b16 %v291
        %v333 = vpack.c.b16 %v331, %v331
        %v334 = vpack.c.b16 %v332, %v332
        %v369 = vunpack.c.l.b16 %v292
        %v370 = vunpack.c.h.b16 %v292
        %v371 = vunpack.c.l.b16 %v293
        %v372 = vunpack.c.h.b16 %v293
        %v373 = vunpack.c.l.b16 %v294
        %v374 = vunpack.c.h.b16 %v294
        %v375 = vunpack.c.l.b16 %v295
        %v376 = vunpack.c.h.b16 %v295
        %v377 = vunpack.c.l.b16 %v296
        %v378 = vunpack.c.h.b16 %v296
        %v379 = vunpack.c.l.b16 %v297
        %v380 = vunpack.c.h.b16 %v297
        %v381 = vunpack.c.l.b16 %v298
        %v382 = vunpack.c.h.b16 %v298
        %v383 = vunpack.c.l.b16 %v299
        %v384 = vunpack.c.h.b16 %v299
        %v385 = vunpack.c.l.b16 %v300
        %v386 = vunpack.c.h.b16 %v300
        %v387 = vunpack.c.l.b16 %v301
        %v388 = vunpack.c.h.b16 %v301
        %v389 = vunpack.c.l.b16 %v302
        %v390 = vunpack.c.h.b16 %v302
        %v391 = vunpack.c.l.b16 %v303
        %v392 = vunpack.c.h.b16 %v303
        %v393 = vunpack.c.l.b16 %v304
        %v394 = vunpack.c.h.b16 %v304
        %v395 = vunpack.c.l.b16 %v305
        %v396 = vunpack.c.h.b16 %v305
        %v397 = vunpack.c.l.b16 %v306
        %v398 = vunpack.c.h.b16 %v306
        %v399 = vunpack.c.l.b16 %v307
        %v400 = vunpack.c.h.b16 %v307
        %v401 = vunpack.c.l.b16 %v308
        %v402 = vunpack.c.h.b16 %v308
        %v403 = vunpack.c.l.b16 %v309
        %v404 = vunpack.c.h.b16 %v309
        %v405 = vunpack.c.l.b16 %v310
        %v406 = vunpack.c.h.b16 %v310
        %v407 = vunpack.c.l.b16 %v311
        %v408 = vunpack.c.h.b16 %v311
        %v409 = vunpack.c.l.b16 %v312
        %v410 = vunpack.c.h.b16 %v312
        %v411 = vunpack.c.l.b16 %v313
        %v412 = vunpack.c.h.b16 %v313
        %v413 = vunpack.c.l.b16 %v314
        %v414 = vunpack.c.h.b16 %v314
        %v415 = vunpack.c.l.b16 %v315
        %v416 = vunpack.c.h.b16 %v315
        %v417 = vunpack.c.l.b16 %v316
        %v418 = vunpack.c.h.b16 %v316
        %v419 = vunpack.c.l.b16 %v317
        %v420 = vunpack.c.h.b16 %v317
        %v421 = vunpack.c.l.b16 %v318
        %v422 = vunpack.c.h.b16 %v318
        %v423 = vunpack.c.l.b16 %v319
        %v424 = vunpack.c.h.b16 %v319
        %v425 = vunpack.c.l.b16 %v320
        %v426 = vunpack.c.h.b16 %v320
        %v427 = vunpack.c.l.b16 %v321
        %v428 = vunpack.c.h.b16 %v321
        %v429 = vunpack.c.l.b16 %v322
        %v430 = vunpack.c.h.b16 %v322
        %v431 = vunpack.c.l.b16 %v323
        %v432 = vunpack.c.h.b16 %v323
        %v433 = vpack.c.b16 %v371, %v369
        %v434 = vpack.c.b16 %v372, %v370
        %v435 = vpack.c.b16 %v375, %v373
        %v436 = vpack.c.b16 %v376, %v374
        %v437 = vpack.c.b16 %v379, %v377
        %v438 = vpack.c.b16 %v380, %v378
        %v439 = vpack.c.b16 %v383, %v381
        %v440 = vpack.c.b16 %v384, %v382
        %v441 = vpack.c.b16 %v387, %v385
        %v442 = vpack.c.b16 %v388, %v386
        %v443 = vpack.c.b16 %v391, %v389
        %v444 = vpack.c.b16 %v392, %v390
        %v445 = vpack.c.b16 %v395, %v393
        %v446 = vpack.c.b16 %v396, %v394
        %v447 = vpack.c.b16 %v399, %v397
        %v448 = vpack.c.b16 %v400, %v398
        %v449 = vpack.c.b16 %v403, %v401
        %v450 = vpack.c.b16 %v404, %v402
        %v451 = vpack.c.b16 %v407, %v405
        %v452 = vpack.c.b16 %v408, %v406
        %v453 = vpack.c.b16 %v411, %v409
        %v454 = vpack.c.b16 %v412, %v410
        %v455 = vpack.c.b16 %v415, %v413
        %v456 = vpack.c.b16 %v416, %v414
        %v457 = vpack.c.b16 %v419, %v417
        %v458 = vpack.c.b16 %v420, %v418
        %v459 = vpack.c.b16 %v423, %v421
        %v460 = vpack.c.b16 %v424, %v422
        %v461 = vpack.c.b16 %v427, %v425
        %v462 = vpack.c.b16 %v428, %v426
        %v463 = vpack.c.b16 %v431, %v429
        %v464 = vpack.c.b16 %v432, %v430
        %497 = vmatpush.bf16.msra.mxu0 %v447
        %498 = vmatpush.bf16.msra.mxu0 %v445
        %499 = vmatpush.bf16.msra.mxu0 %v443
        %500 = vmatpush.bf16.msra.mxu0 %v441
        %501 = vmatpush.bf16.msra.mxu0 %v439
        %502 = vmatpush.bf16.msra.mxu0 %v437
        %503 = vmatpush.bf16.msra.mxu0 %v435
        %504 = vmatpush.bf16.msra.mxu0 %v433
        %505 = vmatmul.bf16.gmra.mxu0 %v333
        %v506 = vpop.f32.mrf.mxu0
        %v507 = vadd.f32 %v326, %v506
        %v508 = vpop.f32.mrf.mxu0
        %509 = vdwg.mxu0
        %510 = vmatpush.bf16.msra.mxu0 %v463
        %511 = vmatpush.bf16.msra.mxu0 %v461
        %512 = vmatpush.bf16.msra.mxu0 %v459
        %513 = vmatpush.bf16.msra.mxu0 %v457
        %514 = vmatpush.bf16.msra.mxu0 %v455
        %515 = vmatpush.bf16.msra.mxu0 %v453
        %516 = vmatpush.bf16.msra.mxu0 %v451
        %517 = vmatpush.bf16.msra.mxu0 %v449
        %518 = vmatmul.bf16.gmra.mxu0 %v334
        %v519 = vpop.f32.mrf.mxu0
        %v520 = vadd.f32 %v507, %v519
        %v521 = vpop.f32.mrf.mxu0
        %522 = vdwg.mxu0
        %523 = vmatpush.bf16.msra.mxu0 %v448
        %524 = vmatpush.bf16.msra.mxu0 %v446
        %525 = vmatpush.bf16.msra.mxu0 %v444
        %526 = vmatpush.bf16.msra.mxu0 %v442
        %527 = vmatpush.bf16.msra.mxu0 %v440
        %528 = vmatpush.bf16.msra.mxu0 %v438
        %529 = vmatpush.bf16.msra.mxu0 %v436
        %530 = vmatpush.bf16.msra.mxu0 %v434
        %531 = vmatmul.bf16.gmra.mxu0 %v333
        %v532 = vpop.f32.mrf.mxu0
        %v533 = vadd.f32 %v327, %v532
        %v534 = vpop.f32.mrf.mxu0
        %535 = vdwg.mxu0
        %536 = vmatpush.bf16.msra.mxu0 %v464
        %537 = vmatpush.bf16.msra.mxu0 %v462
        %538 = vmatpush.bf16.msra.mxu0 %v460
        %539 = vmatpush.bf16.msra.mxu0 %v458
        %540 = vmatpush.bf16.msra.mxu0 %v456
        %541 = vmatpush.bf16.msra.mxu0 %v454
        %542 = vmatpush.bf16.msra.mxu0 %v452
        %543 = vmatpush.bf16.msra.mxu0 %v450
        %544 = vmatmul.bf16.gmra.mxu0 %v334
        %v545 = vpop.f32.mrf.mxu0
        %v546 = vadd.f32 %v533, %v545
        %v547 = vpop.f32.mrf.mxu0
        %548 = vdwg.mxu0
        %v549 = vmul.f32 %v520, 0.5
        %v550 = vmul.f32 %v546, 0.5
        %v551 = vmul.f32 %v520, %v520
        %v552 = vmul.f32 %v546, %v546
        %v553 = vmul.f32 %v551, 0.035677407
        %v554 = vmul.f32 %v552, 0.035677407
        %v555 = vadd.f32 %v553, 0.7978846
        %v556 = vadd.f32 %v554, 0.7978846
        %v557 = vmul.f32 %v520, %v555
        %v558 = vmul.f32 %v546, %v556
        %v559 = vtanh.pop %v557
        %v560 = vtanh.pop %v558
        %v561 = vadd.f32 %v559, 1.0
        %v562 = vadd.f32 %v560, 1.0
        %v563 = vmul.f32 %v549, %v561
        %v564 = vmul.f32 %v550, %v562
        %v565 = vpack.c.bf16 %v563, %v563
        %v566 = vpack.c.bf16 %v564, %v564
        %v567 = vld [vmem:[#allocation8] sm:$0xff]
        %v568 = vld [vmem:[#allocation8 + $0x8] sm:$0xff]
        %v569 = vld [vmem:[#allocation8 + $0x10] sm:$0xff]
        %v570 = vld [vmem:[#allocation8 + $0x18] sm:$0xff]
        %v571 = vld [vmem:[#allocation8 + $0x20] sm:$0xff]
        %v572 = vld [vmem:[#allocation8 + $0x28] sm:$0xff]
        %v573 = vld [vmem:[#allocation8 + $0x30] sm:$0xff]
        %v574 = vld [vmem:[#allocation8 + $0x38] sm:$0xff]
        %v575 = vld [vmem:[#allocation8 + $0x40] sm:$0xff]
        %v576 = vld [vmem:[#allocation8 + $0x48] sm:$0xff]
        %v577 = vld [vmem:[#allocation8 + $0x50] sm:$0xff]
        %v578 = vld [vmem:[#allocation8 + $0x58] sm:$0xff]
        %v579 = vld [vmem:[#allocation8 + $0x60] sm:$0xff]
        %v580 = vld [vmem:[#allocation8 + $0x68] sm:$0xff]
        %v581 = vld [vmem:[#allocation8 + $0x70] sm:$0xff]
        %v582 = vld [vmem:[#allocation8 + $0x78] sm:$0xff]
        %v583 = vld [vmem:[#allocation8 + $0x80] sm:$0xff]
        %v584 = vld [vmem:[#allocation8 + $0x88] sm:$0xff]
        %v585 = vld [vmem:[#allocation8 + $0x90] sm:$0xff]
        %v586 = vld [vmem:[#allocation8 + $0x98] sm:$0xff]
        %v587 = vld [vmem:[#allocation8 + $0xa0] sm:$0xff]
        %v588 = vld [vmem:[#allocation8 + $0xa8] sm:$0xff]
        %v589 = vld [vmem:[#allocation8 + $0xb0] sm:$0xff]
        %v590 = vld [vmem:[#allocation8 + $0xb8] sm:$0xff]
        %v591 = vld [vmem:[#allocation8 + $0xc0] sm:$0xff]
        %v592 = vld [vmem:[#allocation8 + $0xc8] sm:$0xff]
        %v593 = vld [vmem:[#allocation8 + $0xd0] sm:$0xff]
        %v594 = vld [vmem:[#allocation8 + $0xd8] sm:$0xff]
        %v595 = vld [vmem:[#allocation8 + $0xe0] sm:$0xff]
        %v596 = vld [vmem:[#allocation8 + $0xe8] sm:$0xff]
        %v597 = vld [vmem:[#allocation8 + $0xf0] sm:$0xff]
        %v598 = vld [vmem:[#allocation8 + $0xf8] sm:$0xff]
        %v599 = vld [vmem:[%s4] sm:$0x3]
        %v601 = vperm.slane %v599, 0
        %v602 = vperm.slane %v599, 1
        %v637 = vunpack.c.l.b16 %v567
        %v638 = vunpack.c.h.b16 %v567
        %v639 = vunpack.c.l.b16 %v568
        %v640 = vunpack.c.h.b16 %v568
        %v641 = vunpack.c.l.b16 %v569
        %v642 = vunpack.c.h.b16 %v569
        %v643 = vunpack.c.l.b16 %v570
        %v644 = vunpack.c.h.b16 %v570
        %v645 = vunpack.c.l.b16 %v571
        %v646 = vunpack.c.h.b16 %v571
        %v647 = vunpack.c.l.b16 %v572
        %v648 = vunpack.c.h.b16 %v572
        %v649 = vunpack.c.l.b16 %v573
        %v650 = vunpack.c.h.b16 %v573
        %v651 = vunpack.c.l.b16 %v574
        %v652 = vunpack.c.h.b16 %v574
        %v653 = vunpack.c.l.b16 %v575
        %v654 = vunpack.c.h.b16 %v575
        %v655 = vunpack.c.l.b16 %v576
        %v656 = vunpack.c.h.b16 %v576
        %v657 = vunpack.c.l.b16 %v577
        %v658 = vunpack.c.h.b16 %v577
        %v659 = vunpack.c.l.b16 %v578
        %v660 = vunpack.c.h.b16 %v578
        %v661 = vunpack.c.l.b16 %v579
        %v662 = vunpack.c.h.b16 %v579
        %v663 = vunpack.c.l.b16 %v580
        %v664 = vunpack.c.h.b16 %v580
        %v665 = vunpack.c.l.b16 %v581
        %v666 = vunpack.c.h.b16 %v581
        %v667 = vunpack.c.l.b16 %v582
        %v668 = vunpack.c.h.b16 %v582
        %v669 = vunpack.c.l.b16 %v583
        %v670 = vunpack.c.h.b16 %v583
        %v671 = vunpack.c.l.b16 %v584
        %v672 = vunpack.c.h.b16 %v584
        %v673 = vunpack.c.l.b16 %v585
        %v674 = vunpack.c.h.b16 %v585
        %v675 = vunpack.c.l.b16 %v586
        %v676 = vunpack.c.h.b16 %v586
        %v677 = vunpack.c.l.b16 %v587
        %v678 = vunpack.c.h.b16 %v587
        %v679 = vunpack.c.l.b16 %v588
        %v680 = vunpack.c.h.b16 %v588
        %v681 = vunpack.c.l.b16 %v589
        %v682 = vunpack.c.h.b16 %v589
        %v683 = vunpack.c.l.b16 %v590
        %v684 = vunpack.c.h.b16 %v590
        %v685 = vunpack.c.l.b16 %v591
        %v686 = vunpack.c.h.b16 %v591
        %v687 = vunpack.c.l.b16 %v592
        %v688 = vunpack.c.h.b16 %v592
        %v689 = vunpack.c.l.b16 %v593
        %v690 = vunpack.c.h.b16 %v593
        %v691 = vunpack.c.l.b16 %v594
        %v692 = vunpack.c.h.b16 %v594
        %v693 = vunpack.c.l.b16 %v595
        %v694 = vunpack.c.h.b16 %v595
        %v695 = vunpack.c.l.b16 %v596
        %v696 = vunpack.c.h.b16 %v596
        %v697 = vunpack.c.l.b16 %v597
        %v698 = vunpack.c.h.b16 %v597
        %v699 = vunpack.c.l.b16 %v598
        %v700 = vunpack.c.h.b16 %v598
        %v701 = vpack.c.b16 %v639, %v637
        %v702 = vpack.c.b16 %v640, %v638
        %v703 = vpack.c.b16 %v643, %v641
        %v704 = vpack.c.b16 %v644, %v642
        %v705 = vpack.c.b16 %v647, %v645
        %v706 = vpack.c.b16 %v648, %v646
        %v707 = vpack.c.b16 %v651, %v649
        %v708 = vpack.c.b16 %v652, %v650
        %v709 = vpack.c.b16 %v655, %v653
        %v710 = vpack.c.b16 %v656, %v654
        %v711 = vpack.c.b16 %v659, %v657
        %v712 = vpack.c.b16 %v660, %v658
        %v713 = vpack.c.b16 %v663, %v661
        %v714 = vpack.c.b16 %v664, %v662
        %v715 = vpack.c.b16 %v667, %v665
        %v716 = vpack.c.b16 %v668, %v666
        %v717 = vpack.c.b16 %v671, %v669
        %v718 = vpack.c.b16 %v672, %v670
        %v719 = vpack.c.b16 %v675, %v673
        %v720 = vpack.c.b16 %v676, %v674
        %v721 = vpack.c.b16 %v679, %v677
        %v722 = vpack.c.b16 %v680, %v678
        %v723 = vpack.c.b16 %v683, %v681
        %v724 = vpack.c.b16 %v684, %v682
        %v725 = vpack.c.b16 %v687, %v685
        %v726 = vpack.c.b16 %v688, %v686
        %v727 = vpack.c.b16 %v691, %v689
        %v728 = vpack.c.b16 %v692, %v690
        %v729 = vpack.c.b16 %v695, %v693
        %v730 = vpack.c.b16 %v696, %v694
        %v731 = vpack.c.b16 %v699, %v697
        %v732 = vpack.c.b16 %v700, %v698
        %765 = vmatpush.bf16.msra.mxu0 %v715
        %766 = vmatpush.bf16.msra.mxu0 %v713
        %767 = vmatpush.bf16.msra.mxu0 %v711
        %768 = vmatpush.bf16.msra.mxu0 %v709
        %769 = vmatpush.bf16.msra.mxu0 %v707
        %770 = vmatpush.bf16.msra.mxu0 %v705
        %771 = vmatpush.bf16.msra.mxu0 %v703
        %772 = vmatpush.bf16.msra.mxu0 %v701
        %773 = vmatmul.bf16.gmra.mxu0 %v565
        %v774 = vpop.f32.mrf.mxu0
        %v775 = vadd.f32 %v601, %v774
        %v776 = vpop.f32.mrf.mxu0
        %777 = vdwg.mxu0
        %778 = vmatpush.bf16.msra.mxu0 %v731
        %779 = vmatpush.bf16.msra.mxu0 %v729
        %780 = vmatpush.bf16.msra.mxu0 %v727
        %781 = vmatpush.bf16.msra.mxu0 %v725
        %782 = vmatpush.bf16.msra.mxu0 %v723
        %783 = vmatpush.bf16.msra.mxu0 %v721
        %784 = vmatpush.bf16.msra.mxu0 %v719
        %785 = vmatpush.bf16.msra.mxu0 %v717
        %786 = vmatmul.bf16.gmra.mxu0 %v566
        %v787 = vpop.f32.mrf.mxu0
        %v788 = vadd.f32 %v775, %v787
        %v789 = vpop.f32.mrf.mxu0
        %790 = vdwg.mxu0
        %791 = vmatpush.bf16.msra.mxu0 %v716
        %792 = vmatpush.bf16.msra.mxu0 %v714
        %793 = vmatpush.bf16.msra.mxu0 %v712
        %794 = vmatpush.bf16.msra.mxu0 %v710
        %795 = vmatpush.bf16.msra.mxu0 %v708
        %796 = vmatpush.bf16.msra.mxu0 %v706
        %797 = vmatpush.bf16.msra.mxu0 %v704
        %798 = vmatpush.bf16.msra.mxu0 %v702
        %799 = vmatmul.bf16.gmra.mxu0 %v565
        %v800 = vpop.f32.mrf.mxu0
        %v801 = vadd.f32 %v602, %v800
        %v802 = vpop.f32.mrf.mxu0
        %803 = vdwg.mxu0
        %804 = vmatpush.bf16.msra.mxu0 %v732
        %805 = vmatpush.bf16.msra.mxu0 %v730
        %806 = vmatpush.bf16.msra.mxu0 %v728
        %807 = vmatpush.bf16.msra.mxu0 %v726
        %808 = vmatpush.bf16.msra.mxu0 %v724
        %809 = vmatpush.bf16.msra.mxu0 %v722
        %810 = vmatpush.bf16.msra.mxu0 %v720
        %811 = vmatpush.bf16.msra.mxu0 %v718
        %812 = vmatmul.bf16.gmra.mxu0 %v566
        %v813 = vpop.f32.mrf.mxu0
        %v814 = vadd.f32 %v801, %v813
        %v815 = vpop.f32.mrf.mxu0
        %816 = vdwg.mxu0
        %v817 = vpack.c.bf16 %v814, %v788
        %818 = vst [vmem:[%s290] sm:$0xff] %v817
        %s819 = sand.u32 %s142, 1
        %s820 = scalar_lea.sflag [#allocation4], %s819
        %s821 = sand.u32 %s142, 1
        %s822 = smul.addr %s821, 8
        %s823 = scalar_lea.vmem [#allocation10], %s822
        // Predicated region
        $region57: #{tpu_custom_call.1} parent=39 // pred_check
          %p824 = pneg %p152
        $region58: #{tpu_custom_call.1} parent=39 // pred_check_branch
          %826 = sbr.rel (%p824) target = $region60
        $region59: #{tpu_custom_call.1} parent=39 // pred_region
          %828 = vsyncadd %s820, 0
          %s829 = smul.addr %s24, 2
          %s830 = smul.addr %s829, 4
          %s831 = scalar_lea.hbm %s5, %s830
          %s833 = sshll.u32 %s823, 4
          %s834 = int_to_ptr.vmem [resolvable:$true] %s833
          %s835 = sshll.u32 %s831, 4
          %s836 = int_to_ptr.hbm [resolvable:$true] %s835
          %838 = dma.vmem_to_hbm [thread:$0]  %s834, 128, %s836, %s820
        $region60: #{tpu_custom_call.1} parent=39 // pred_fallthru
          _
      $region40: #{tpu_custom_call.1} parent=5 // pred_fallthru
        _
      %p839 = scmp.le.s32.totalorder 2, %s19
      // Predicated region
      $region61: #{tpu_custom_call.1} parent=5 // pred_check
        %p840 = pneg %p839
      $region62: #{tpu_custom_call.1} parent=5 // pred_check_branch
        %842 = sbr.rel (%p840) target = $region64
      $region63: #{tpu_custom_call.1} parent=5 // pred_region
        %s843 = ssub.s32 %s19, 2
        // Predicated region
        $region65: #{tpu_custom_call.1} parent=63 // pred_check
          %p844 = pneg %p158
        $region66: #{tpu_custom_call.1} parent=63 // pred_check_branch
          %846 = sbr.rel (%p844) target = $region68
        $region67: #{tpu_custom_call.1} parent=63 // pred_region
          %s847 = sand.u32 %s143, 1
          %s848 = scalar_lea.sflag [#allocation4], %s847
          %s849 = sand.u32 %s143, 1
          %s850 = smul.addr %s849, 8
          %s851 = scalar_lea.vmem [#allocation10], %s850
          %853 = dma.done %s848, 128
        $region68: #{tpu_custom_call.1} parent=63 // pred_fallthru
          _
      $region64: #{tpu_custom_call.1} parent=5 // pred_fallthru
        _
    $region6: #{tpu_custom_call.1} parent=1 // loop_footer
      %s23 = sadd.s32 1, %s19
    $region7: #{tpu_custom_call.1} parent=1 // loop_footer_branch
      %18 = sbr.rel target = $region3
    $region8: #{tpu_custom_call.1} parent=1 // loop_exit
      _
    %854 = vsyncpa [#allocation3], 1
    %s855 = scalar_lea.sflag [#allocation3], 1
    %856 = vsyncpa %s855, 1
    %857 = vsyncpa [#allocation6], 1
    %858 = vsyncpa [#allocation9], 1
    %859 = vsyncpa [#allocation4], 1
    %s860 = scalar_lea.sflag [#allocation4], 1
    %861 = vsyncpa %s860, 1

</llo_original>
